<compile_context>
chip_gen: v7x
topology: tpu7x:2x2x1
jax: 0.10.0
libtpu: 0.0.40
codegen_flags: <defaults>
</compile_context>

<pallas_src>
import jax
import jax.numpy as jnp
from jax.experimental import pallas as pl
from jax.experimental.pallas import tpu as pltpu


def _mlp_sigmoid_kernel(x_ref, *refs):
    """refs = (w0T, b0T, w1T, b1T, ..., wLT, bLT, out_ref).

    x_ref:   (1, T)      batch on lanes
    wT refs: (out, in)   pre-transposed weights
    bT refs: (out, 1)
    out_ref: (1, T)
    """
    out_ref = refs[-1]
    param_refs = refs[:-1]
    n_layers = len(param_refs) // 2

    h = x_ref[...].astype(jnp.float32)                       # (1, T)
    for i in range(n_layers):
        wT = param_refs[2 * i][...].astype(jnp.float32)       # (out, in)
        bT = param_refs[2 * i + 1][...].astype(jnp.float32)   # (out, 1)
        in_dim = wT.shape[1]
        if in_dim == 1:
            # Linear(1 -> H): K=1 matmul == outer-product broadcast on the VPU.
            h = wT * h + bT                                    # (H, T)
        else:
            # Linear(H -> H) or Linear(H -> 1): lane-dense MXU dot.
            h = jnp.dot(wT, h, preferred_element_type=jnp.float32) + bT
        if i < n_layers - 1:
            # sigmoid(x) == 0.5*tanh(0.5*x) + 0.5 : one EUP transcendental,
            # no divide.
            h = 0.5 * jnp.tanh(0.5 * h) + 0.5
    out_ref[...] = h.astype(out_ref.dtype)


def mlp_sigmoid_forward(x, params, *, batch_tile=512):
    """x: (B, 1) float32.  params: flat [w0, b0, ..., wL, bL] with w: (in, out),
    b: (1, out) (PyTorch-equivalent y = x @ W + b per layer)."""
    assert batch_tile % 128 == 0, "batch_tile must be a multiple of 128 lanes"
    batch = x.shape[0]
    n_tiles = pl.cdiv(batch, batch_tile)
    batch_pad = n_tiles * batch_tile

    # batch -> lane axis, zero-pad the ragged tail (sliced off afterwards).
    xt = x.reshape(batch).astype(jnp.float32)
    if batch_pad != batch:
        xt = jnp.pad(xt, (0, batch_pad - batch))
    xt = xt.reshape(1, batch_pad)

    # Pre-transpose params on the host so the kernel needs no XLU transpose.
    kparams = []
    in_specs = [pl.BlockSpec((1, batch_tile), lambda i: (0, i))]
    for p in params:
        pt = jnp.asarray(p).T                                  # (out, in)/(out,1)
        kparams.append(pt)
        # Small full-array blocks, identical for every grid step.
        in_specs.append(pl.BlockSpec(pt.shape, lambda i: (0, 0)))

    out_specs = pl.BlockSpec((1, batch_tile), lambda i: (0, i))

    out = pl.pallas_call(
        _mlp_sigmoid_kernel,
        out_shape=jax.ShapeDtypeStruct((1, batch_pad), jnp.float32),
        grid=(n_tiles,),
        in_specs=in_specs,
        out_specs=out_specs,
        compiler_params=pltpu.CompilerParams(
            dimension_semantics=("parallel",)),
    )(xt, *kparams)

    return out.reshape(batch_pad, 1)[:batch]


def init_params(key, num_hidden_layers, hidden_dim):
    """Deterministic PyTorch-style init: U(-1/sqrt(fan_in), 1/sqrt(fan_in))."""
    dims = [1] + [hidden_dim] * num_hidden_layers + [1]
    params = []
    for li in range(len(dims) - 1):
        fan_in, fan_out = dims[li], dims[li + 1]
        key, kw, kb = jax.random.split(key, 3)
        bound = 1.0 / (fan_in ** 0.5)
        w = jax.random.uniform(kw, (fan_in, fan_out), jnp.float32, -bound, bound)
        b = jax.random.uniform(kb, (1, fan_out), jnp.float32, -bound, bound)
        params.extend([w, b])
    return params


def reference_forward(x, params):
    h = x
    n_layers = len(params) // 2
    for i in range(n_layers):
        w, b = params[2 * i], params[2 * i + 1]
        h = h @ w + b
        if i < n_layers - 1:
            h = jax.nn.sigmoid(h)
    return h


if __name__ == "__main__":
    num_hidden_layers = 3
    hidden_dim = 32

    key = jax.random.PRNGKey(0)
    key, kx_small, kx_big = jax.random.split(key, 3)
    params = init_params(key, num_hidden_layers, hidden_dim)

    # Small test (single padded tile).
    batch_small = 16
    x_small = jax.random.normal(kx_small, (batch_small, 1), jnp.float32)
    out_small = jax.block_until_ready(mlp_sigmoid_forward(x_small, params))
    ref_small = reference_forward(x_small, params)
    assert out_small.shape == (batch_small, 1) and out_small.dtype == jnp.float32
    assert jnp.allclose(out_small, ref_small, atol=1e-5, rtol=1e-5)

    # Larger test: exercises multi-tile grid (>= 2 parallel steps) and the
    # ragged-tail padding path (2000 -> 4 tiles of 512).
    batch_big = 2000
    x_big = jax.random.normal(kx_big, (batch_big, 1), jnp.float32)
    out_big = jax.block_until_ready(mlp_sigmoid_forward(x_big, params, batch_tile=512))
    ref_big = reference_forward(x_big, params)
    assert out_big.shape == (batch_big, 1) and out_big.dtype == jnp.float32
    assert jnp.allclose(out_big, ref_big, atol=1e-5, rtol=1e-5)

    print("KERNEL_OK")
</pallas_src>

<mosaic_0001>
module attributes {stable_mosaic.version = 11 : i64} {
  func.func @_mlp_sigmoid_kernel(%arg0: i32, %arg1: memref<1x512xf32, #tpu.memory_space<vmem>>, %arg2: memref<32x1xf32, #tpu.memory_space<vmem>>, %arg3: memref<32x1xf32, #tpu.memory_space<vmem>>, %arg4: memref<32x32xf32, #tpu.memory_space<vmem>>, %arg5: memref<32x1xf32, #tpu.memory_space<vmem>>, %arg6: memref<32x32xf32, #tpu.memory_space<vmem>>, %arg7: memref<32x1xf32, #tpu.memory_space<vmem>>, %arg8: memref<1x32xf32, #tpu.memory_space<vmem>>, %arg9: memref<1x1xf32, #tpu.memory_space<vmem>>, %arg10: memref<1x512xf32, #tpu.memory_space<vmem>>) attributes {dimension_semantics = [#tpu.dimension_semantics<parallel>], iteration_bounds = array<i64: 1>, scalar_prefetch = 0 : i64, scratch_operands = 0 : i64, tpu.core_type = #tpu.core_type<tc>, window_params = [{transform_indices = @transform_0, window_bounds = array<i64: 1, 512>}, {pipeline_mode = #tpu.pipeline_mode<synchronous>, transform_indices = @transform_1, window_bounds = array<i64: 32, 1>}, {pipeline_mode = #tpu.pipeline_mode<synchronous>, transform_indices = @transform_2, window_bounds = array<i64: 32, 1>}, {pipeline_mode = #tpu.pipeline_mode<synchronous>, transform_indices = @transform_3, window_bounds = array<i64: 32, 32>}, {pipeline_mode = #tpu.pipeline_mode<synchronous>, transform_indices = @transform_4, window_bounds = array<i64: 32, 1>}, {pipeline_mode = #tpu.pipeline_mode<synchronous>, transform_indices = @transform_5, window_bounds = array<i64: 32, 32>}, {pipeline_mode = #tpu.pipeline_mode<synchronous>, transform_indices = @transform_6, window_bounds = array<i64: 32, 1>}, {pipeline_mode = #tpu.pipeline_mode<synchronous>, transform_indices = @transform_7, window_bounds = array<i64: 1, 32>}, {pipeline_mode = #tpu.pipeline_mode<synchronous>, transform_indices = @transform_8, window_bounds = array<i64: 1, 1>}, {transform_indices = @transform_9, window_bounds = array<i64: 1, 512>}]} {
    %c0 = arith.constant 0 : index
    %c0_0 = arith.constant 0 : index
    %0 = vector.load %arg1[%c0, %c0_0] : memref<1x512xf32, #tpu.memory_space<vmem>>, vector<1x512xf32>
    %c0_1 = arith.constant 0 : index
    %c0_2 = arith.constant 0 : index
    %1 = vector.load %arg2[%c0_1, %c0_2] : memref<32x1xf32, #tpu.memory_space<vmem>>, vector<32x1xf32>
    %c0_3 = arith.constant 0 : index
    %c0_4 = arith.constant 0 : index
    %2 = vector.load %arg3[%c0_3, %c0_4] : memref<32x1xf32, #tpu.memory_space<vmem>>, vector<32x1xf32>
    %3 = vector.broadcast %1 : vector<32x1xf32> to vector<32x512xf32>
    %4 = vector.broadcast %0 : vector<1x512xf32> to vector<32x512xf32>
    %5 = arith.mulf %3, %4 : vector<32x512xf32>
    %6 = vector.broadcast %2 : vector<32x1xf32> to vector<32x512xf32>
    %7 = arith.addf %5, %6 : vector<32x512xf32>
    %cst = arith.constant 5.000000e-01 : f32
    %8 = vector.broadcast %cst : f32 to vector<32x512xf32>
    %9 = arith.mulf %8, %7 : vector<32x512xf32>
    %10 = math.tanh %9 : vector<32x512xf32>
    %cst_5 = arith.constant 5.000000e-01 : f32
    %11 = vector.broadcast %cst_5 : f32 to vector<32x512xf32>
    %12 = arith.mulf %11, %10 : vector<32x512xf32>
    %cst_6 = arith.constant 5.000000e-01 : f32
    %13 = vector.broadcast %cst_6 : f32 to vector<32x512xf32>
    %14 = arith.addf %12, %13 : vector<32x512xf32>
    %c0_7 = arith.constant 0 : index
    %c0_8 = arith.constant 0 : index
    %15 = vector.load %arg4[%c0_7, %c0_8] : memref<32x32xf32, #tpu.memory_space<vmem>>, vector<32x32xf32>
    %c0_9 = arith.constant 0 : index
    %c0_10 = arith.constant 0 : index
    %16 = vector.load %arg5[%c0_9, %c0_10] : memref<32x1xf32, #tpu.memory_space<vmem>>, vector<32x1xf32>
    %cst_11 = arith.constant dense<0.000000e+00> : vector<32x512xf32>
    %17 = tpu.matmul %15, %14, %cst_11 {dimension_numbers = #tpu.dot_dimension_numbers<[1], [0], [0], [1], [0, 0, 1, 1], [], []>} : vector<32x32xf32>, vector<32x512xf32>, vector<32x512xf32> -> vector<32x512xf32>
    %18 = vector.broadcast %16 : vector<32x1xf32> to vector<32x512xf32>
    %19 = arith.addf %17, %18 : vector<32x512xf32>
    %cst_12 = arith.constant 5.000000e-01 : f32
    %20 = vector.broadcast %cst_12 : f32 to vector<32x512xf32>
    %21 = arith.mulf %20, %19 : vector<32x512xf32>
    %22 = math.tanh %21 : vector<32x512xf32>
    %cst_13 = arith.constant 5.000000e-01 : f32
    %23 = vector.broadcast %cst_13 : f32 to vector<32x512xf32>
    %24 = arith.mulf %23, %22 : vector<32x512xf32>
    %cst_14 = arith.constant 5.000000e-01 : f32
    %25 = vector.broadcast %cst_14 : f32 to vector<32x512xf32>
    %26 = arith.addf %24, %25 : vector<32x512xf32>
    %c0_15 = arith.constant 0 : index
    %c0_16 = arith.constant 0 : index
    %27 = vector.load %arg6[%c0_15, %c0_16] : memref<32x32xf32, #tpu.memory_space<vmem>>, vector<32x32xf32>
    %c0_17 = arith.constant 0 : index
    %c0_18 = arith.constant 0 : index
    %28 = vector.load %arg7[%c0_17, %c0_18] : memref<32x1xf32, #tpu.memory_space<vmem>>, vector<32x1xf32>
    %cst_19 = arith.constant dense<0.000000e+00> : vector<32x512xf32>
    %29 = tpu.matmul %27, %26, %cst_19 {dimension_numbers = #tpu.dot_dimension_numbers<[1], [0], [0], [1], [0, 0, 1, 1], [], []>} : vector<32x32xf32>, vector<32x512xf32>, vector<32x512xf32> -> vector<32x512xf32>
    %30 = vector.broadcast %28 : vector<32x1xf32> to vector<32x512xf32>
    %31 = arith.addf %29, %30 : vector<32x512xf32>
    %cst_20 = arith.constant 5.000000e-01 : f32
    %32 = vector.broadcast %cst_20 : f32 to vector<32x512xf32>
    %33 = arith.mulf %32, %31 : vector<32x512xf32>
    %34 = math.tanh %33 : vector<32x512xf32>
    %cst_21 = arith.constant 5.000000e-01 : f32
    %35 = vector.broadcast %cst_21 : f32 to vector<32x512xf32>
    %36 = arith.mulf %35, %34 : vector<32x512xf32>
    %cst_22 = arith.constant 5.000000e-01 : f32
    %37 = vector.broadcast %cst_22 : f32 to vector<32x512xf32>
    %38 = arith.addf %36, %37 : vector<32x512xf32>
    %c0_23 = arith.constant 0 : index
    %c0_24 = arith.constant 0 : index
    %39 = vector.load %arg8[%c0_23, %c0_24] : memref<1x32xf32, #tpu.memory_space<vmem>>, vector<1x32xf32>
    %c0_25 = arith.constant 0 : index
    %c0_26 = arith.constant 0 : index
    %40 = vector.load %arg9[%c0_25, %c0_26] : memref<1x1xf32, #tpu.memory_space<vmem>>, vector<1x1xf32>
    %cst_27 = arith.constant dense<0.000000e+00> : vector<1x512xf32>
    %41 = tpu.matmul %39, %38, %cst_27 {dimension_numbers = #tpu.dot_dimension_numbers<[1], [0], [0], [1], [0, 0, 1, 1], [], []>} : vector<1x32xf32>, vector<32x512xf32>, vector<1x512xf32> -> vector<1x512xf32>
    %42 = vector.broadcast %40 : vector<1x1xf32> to vector<1x512xf32>
    %43 = arith.addf %41, %42 : vector<1x512xf32>
    %c0_28 = arith.constant 0 : index
    %c0_29 = arith.constant 0 : index
    %44 = vector.load %arg10[%c0_28, %c0_29] : memref<1x512xf32, #tpu.memory_space<vmem>>, vector<1x512xf32>
    tpu.vector_store %arg10[%c0_28, %c0_29], %43 {strides = array<i32>} : memref<1x512xf32, #tpu.memory_space<vmem>>, vector<1x512xf32>,
    return
  }
  func.func @transform_0(%arg0: i32) -> (i32, i32) {
    %c0_i32 = arith.constant 0 : i32
    %c0_i32_0 = arith.constant 0 : i32
    return %c0_i32, %arg0 : i32, i32
  }
  func.func @transform_1(%arg0: i32) -> (i32, i32) {
    %c0_i32 = arith.constant 0 : i32
    %c0_i32_0 = arith.constant 0 : i32
    %c0_i32_1 = arith.constant 0 : i32
    return %c0_i32, %c0_i32_0 : i32, i32
  }
  func.func @transform_2(%arg0: i32) -> (i32, i32) {
    %c0_i32 = arith.constant 0 : i32
    %c0_i32_0 = arith.constant 0 : i32
    %c0_i32_1 = arith.constant 0 : i32
    return %c0_i32, %c0_i32_0 : i32, i32
  }
  func.func @transform_3(%arg0: i32) -> (i32, i32) {
    %c0_i32 = arith.constant 0 : i32
    %c0_i32_0 = arith.constant 0 : i32
    %c0_i32_1 = arith.constant 0 : i32
    return %c0_i32, %c0_i32_0 : i32, i32
  }
  func.func @transform_4(%arg0: i32) -> (i32, i32) {
    %c0_i32 = arith.constant 0 : i32
    %c0_i32_0 = arith.constant 0 : i32
    %c0_i32_1 = arith.constant 0 : i32
    return %c0_i32, %c0_i32_0 : i32, i32
  }
  func.func @transform_5(%arg0: i32) -> (i32, i32) {
    %c0_i32 = arith.constant 0 : i32
    %c0_i32_0 = arith.constant 0 : i32
    %c0_i32_1 = arith.constant 0 : i32
    return %c0_i32, %c0_i32_0 : i32, i32
  }
  func.func @transform_6(%arg0: i32) -> (i32, i32) {
    %c0_i32 = arith.constant 0 : i32
    %c0_i32_0 = arith.constant 0 : i32
    %c0_i32_1 = arith.constant 0 : i32
    return %c0_i32, %c0_i32_0 : i32, i32
  }
  func.func @transform_7(%arg0: i32) -> (i32, i32) {
    %c0_i32 = arith.constant 0 : i32
    %c0_i32_0 = arith.constant 0 : i32
    %c0_i32_1 = arith.constant 0 : i32
    return %c0_i32, %c0_i32_0 : i32, i32
  }
  func.func @transform_8(%arg0: i32) -> (i32, i32) {
    %c0_i32 = arith.constant 0 : i32
    %c0_i32_0 = arith.constant 0 : i32
    %c0_i32_1 = arith.constant 0 : i32
    return %c0_i32, %c0_i32_0 : i32, i32
  }
  func.func @transform_9(%arg0: i32) -> (i32, i32) {
    %c0_i32 = arith.constant 0 : i32
    %c0_i32_0 = arith.constant 0 : i32
    return %c0_i32, %arg0 : i32, i32
  }
}

</mosaic_0001>

<llo_original>
// kernel: tpu_custom_call.1
$region0: #{tpu_custom_call.1}
  #allocation0 [shape = 'u32[]', space=smem, size = 0x4, offset = 0x4, fixed_abs, tag = 'smem constant byte address 0x4 - core index']
  #allocation1 [shape = 'u32[144,128]{1,0:T(1,128)}', space=vmem, size = 0x12000, scoped, tag = 'internal scratch']
  #allocation2 [shape = 'f32[1,1]{1,0:T(1,128)S(1)}', space=vmem, size = 0x200, scoped, tag = 'scoped memory for tpu_custom_call.1']
  %s0 = inlined_call_operand.vmem [shape: f32[1,512], index: 0, kind: input, shape index: {}]
  %s1 = inlined_call_operand.vmem [shape: f32[32,1], index: 1, kind: input, shape index: {}]
  %s2 = inlined_call_operand.vmem [shape: f32[32,1], index: 2, kind: input, shape index: {}]
  %s3 = inlined_call_operand.vmem [shape: f32[32,32], index: 3, kind: input, shape index: {}]
  %s4 = inlined_call_operand.vmem [shape: f32[32,1], index: 4, kind: input, shape index: {}]
  %s5 = inlined_call_operand.vmem [shape: f32[32,32], index: 5, kind: input, shape index: {}]
  %s6 = inlined_call_operand.vmem [shape: f32[32,1], index: 6, kind: input, shape index: {}]
  %s7 = inlined_call_operand.vmem [shape: f32[1,32], index: 7, kind: input, shape index: {}]
  %s8 = inlined_call_operand.<no memory space> [shape: f32[1,1], index: 8, kind: input, shape index: {}]
  %s9 = inlined_call_operand.hbm [shape: f32[1,512], index: 9, kind: output, shape index: {}]
  %s10 = sld [smem:[#allocation0]]
  $region46: #{tpu_custom_call.1} parent=0
    _
  %s12 = ssub.s32 1, %s10
  %s13 = scalar_select 0, %s12, %s10
  %v14 = vstv %s8
  %15 = vst [vmem:[#allocation2] sm:$0x1] %v14
  $region1: #{tpu_custom_call.1} parent=0
    #allocation3 [shape = 'u8[2048]{0}', space=vmem, size = 0x800, scoped, tag = 'output window, operand 0, single buffered']
    #allocation4 [shape = 's32[1]{0}', space=sflag, size = 0x4, scoped, tag = 'scoped memory for tpu_custom_call.1']
    %16 = vsyncpa [#allocation4], 0
    // Predicated region
    $region2: #{tpu_custom_call.1} parent=1 // pred_check
      _
    $region3: #{tpu_custom_call.1} parent=1 // pred_check_branch
      %18 = sbr.rel (0) target = $region5
    $region4: #{tpu_custom_call.1} parent=1 // pred_region
      _
    $region5: #{tpu_custom_call.1} parent=1 // pred_fallthru
      _
    // Predicated region
    $region6: #{tpu_custom_call.1} parent=1 // pred_check
      _
    $region7: #{tpu_custom_call.1} parent=1 // pred_check_branch
      %20 = sbr.rel (0) target = $region9
    $region8: #{tpu_custom_call.1} parent=1 // pred_region
      _
    $region9: #{tpu_custom_call.1} parent=1 // pred_fallthru
      _
    // Predicated region
    $region10: #{tpu_custom_call.1} parent=1 // pred_check
      _
    $region11: #{tpu_custom_call.1} parent=1 // pred_check_branch
      %22 = sbr.rel (0) target = $region13
    $region12: #{tpu_custom_call.1} parent=1 // pred_region
      _
    $region13: #{tpu_custom_call.1} parent=1 // pred_fallthru
      _
    // Predicated region
    $region14: #{tpu_custom_call.1} parent=1 // pred_check
      _
    $region15: #{tpu_custom_call.1} parent=1 // pred_check_branch
      %24 = sbr.rel (0) target = $region17
    $region16: #{tpu_custom_call.1} parent=1 // pred_region
      _
    $region17: #{tpu_custom_call.1} parent=1 // pred_fallthru
      _
    // Predicated region
    $region18: #{tpu_custom_call.1} parent=1 // pred_check
      _
    $region19: #{tpu_custom_call.1} parent=1 // pred_check_branch
      %26 = sbr.rel (0) target = $region21
    $region20: #{tpu_custom_call.1} parent=1 // pred_region
      _
    $region21: #{tpu_custom_call.1} parent=1 // pred_fallthru
      _
    // Predicated region
    $region22: #{tpu_custom_call.1} parent=1 // pred_check
      _
    $region23: #{tpu_custom_call.1} parent=1 // pred_check_branch
      %28 = sbr.rel (0) target = $region25
    $region24: #{tpu_custom_call.1} parent=1 // pred_region
      _
    $region25: #{tpu_custom_call.1} parent=1 // pred_fallthru
      _
    // Predicated region
    $region26: #{tpu_custom_call.1} parent=1 // pred_check
      _
    $region27: #{tpu_custom_call.1} parent=1 // pred_check_branch
      %30 = sbr.rel (0) target = $region29
    $region28: #{tpu_custom_call.1} parent=1 // pred_region
      _
    $region29: #{tpu_custom_call.1} parent=1 // pred_fallthru
      _
    // Predicated region
    $region30: #{tpu_custom_call.1} parent=1 // pred_check
      _
    $region31: #{tpu_custom_call.1} parent=1 // pred_check_branch
      %32 = sbr.rel (0) target = $region33
    $region32: #{tpu_custom_call.1} parent=1 // pred_region
      _
    $region33: #{tpu_custom_call.1} parent=1 // pred_fallthru
      _
    // Predicated region
    $region34: #{tpu_custom_call.1} parent=1 // pred_check
      _
    $region35: #{tpu_custom_call.1} parent=1 // pred_check_branch
      %34 = sbr.rel (0) target = $region37
    $region36: #{tpu_custom_call.1} parent=1 // pred_region
      _
    $region37: #{tpu_custom_call.1} parent=1 // pred_fallthru
      _
    %v35 = vld [vmem:[%s0] sm:$0xf]
    %v36 = vld [vmem:[%s1] sm:$0xff]
    %v37 = vld [vmem:[%s1 + $0x8] sm:$0xff]
    %v38 = vld [vmem:[%s1 + $0x10] sm:$0xff]
    %v39 = vld [vmem:[%s1 + $0x18] sm:$0xff]
    %v40 = vld [vmem:[%s2] sm:$0xff]
    %v41 = vld [vmem:[%s2 + $0x8] sm:$0xff]
    %v42 = vld [vmem:[%s2 + $0x10] sm:$0xff]
    %v43 = vld [vmem:[%s2 + $0x18] sm:$0xff]
    %45 = vset.pattern.permute.xlu0 0
    %46 = vperm.xlu0 %45, %v36
    %v47 = vpop.permute.xlu0 %46
    %50 = vset.pattern.permute.xlu0 0
    %51 = vperm.xlu0 %50, %v37
    %v52 = vpop.permute.xlu0 %51
    %55 = vset.pattern.permute.xlu0 0
    %56 = vperm.xlu0 %55, %v38
    %v57 = vpop.permute.xlu0 %56
    %60 = vset.pattern.permute.xlu0 0
    %61 = vperm.xlu0 %60, %v39
    %v62 = vpop.permute.xlu0 %61
    %v65 = vlaneseq
    %v66 = vshrl.u32 %v65, 7
    %v67 = vsub.s32 0, %v66
    %v68 = vrot.slane %v35, %v67
    %v69 = vlaneseq
    %v70 = vshrl.u32 %v69, 7
    %v71 = vsub.s32 1, %v70
    %v72 = vrot.slane %v35, %v71
    %v73 = vlaneseq
    %v74 = vshrl.u32 %v73, 7
    %v75 = vsub.s32 2, %v74
    %v76 = vrot.slane %v35, %v75
    %v77 = vlaneseq
    %v78 = vshrl.u32 %v77, 7
    %v79 = vsub.s32 3, %v78
    %v80 = vrot.slane %v35, %v79
    %v85 = vmul.f32 %v47, %v68
    %v86 = vmul.f32 %v47, %v72
    %v87 = vmul.f32 %v47, %v76
    %v88 = vmul.f32 %v47, %v80
    %v89 = vmul.f32 %v52, %v68
    %v90 = vmul.f32 %v52, %v72
    %v91 = vmul.f32 %v52, %v76
    %v92 = vmul.f32 %v52, %v80
    %v93 = vmul.f32 %v57, %v68
    %v94 = vmul.f32 %v57, %v72
    %v95 = vmul.f32 %v57, %v76
    %v96 = vmul.f32 %v57, %v80
    %v97 = vmul.f32 %v62, %v68
    %v98 = vmul.f32 %v62, %v72
    %v99 = vmul.f32 %v62, %v76
    %v100 = vmul.f32 %v62, %v80
    %102 = vset.pattern.permute.xlu0 0
    %103 = vperm.xlu0 %102, %v40
    %v104 = vpop.permute.xlu0 %103
    %107 = vset.pattern.permute.xlu0 0
    %108 = vperm.xlu0 %107, %v41
    %v109 = vpop.permute.xlu0 %108
    %112 = vset.pattern.permute.xlu0 0
    %113 = vperm.xlu0 %112, %v42
    %v114 = vpop.permute.xlu0 %113
    %117 = vset.pattern.permute.xlu0 0
    %118 = vperm.xlu0 %117, %v43
    %v119 = vpop.permute.xlu0 %118
    %v121 = vadd.f32 %v85, %v104
    %v122 = vadd.f32 %v86, %v104
    %v123 = vadd.f32 %v87, %v104
    %v124 = vadd.f32 %v88, %v104
    %v125 = vadd.f32 %v89, %v109
    %v126 = vadd.f32 %v90, %v109
    %v127 = vadd.f32 %v91, %v109
    %v128 = vadd.f32 %v92, %v109
    %v129 = vadd.f32 %v93, %v114
    %v130 = vadd.f32 %v94, %v114
    %v131 = vadd.f32 %v95, %v114
    %v132 = vadd.f32 %v96, %v114
    %v133 = vadd.f32 %v97, %v119
    %v134 = vadd.f32 %v98, %v119
    %v135 = vadd.f32 %v99, %v119
    %v136 = vadd.f32 %v100, %v119
    %v137 = vmul.f32 %v121, 0.5
    %v138 = vmul.f32 %v122, 0.5
    %v139 = vmul.f32 %v123, 0.5
    %v140 = vmul.f32 %v124, 0.5
    %v141 = vmul.f32 %v125, 0.5
    %v142 = vmul.f32 %v126, 0.5
    %v143 = vmul.f32 %v127, 0.5
    %v144 = vmul.f32 %v128, 0.5
    %v145 = vmul.f32 %v129, 0.5
    %v146 = vmul.f32 %v130, 0.5
    %v147 = vmul.f32 %v131, 0.5
    %v148 = vmul.f32 %v132, 0.5
    %v149 = vmul.f32 %v133, 0.5
    %v150 = vmul.f32 %v134, 0.5
    %v151 = vmul.f32 %v135, 0.5
    %v152 = vmul.f32 %v136, 0.5
    %v153 = vtanh.pop %v137
    %v154 = vtanh.pop %v138
    %v155 = vtanh.pop %v139
    %v156 = vtanh.pop %v140
    %v157 = vtanh.pop %v141
    %v158 = vtanh.pop %v142
    %v159 = vtanh.pop %v143
    %v160 = vtanh.pop %v144
    %v161 = vtanh.pop %v145
    %v162 = vtanh.pop %v146
    %v163 = vtanh.pop %v147
    %v164 = vtanh.pop %v148
    %v165 = vtanh.pop %v149
    %v166 = vtanh.pop %v150
    %v167 = vtanh.pop %v151
    %v168 = vtanh.pop %v152
    %v169 = vmul.f32 %v153, 0.5
    %v170 = vmul.f32 %v154, 0.5
    %v171 = vmul.f32 %v155, 0.5
    %v172 = vmul.f32 %v156, 0.5
    %v173 = vmul.f32 %v157, 0.5
    %v174 = vmul.f32 %v158, 0.5
    %v175 = vmul.f32 %v159, 0.5
    %v176 = vmul.f32 %v160, 0.5
    %v177 = vmul.f32 %v161, 0.5
    %v178 = vmul.f32 %v162, 0.5
    %v179 = vmul.f32 %v163, 0.5
    %v180 = vmul.f32 %v164, 0.5
    %v181 = vmul.f32 %v165, 0.5
    %v182 = vmul.f32 %v166, 0.5
    %v183 = vmul.f32 %v167, 0.5
    %v184 = vmul.f32 %v168, 0.5
    %v185 = vadd.f32 %v169, 0.5
    %v186 = vadd.f32 %v170, 0.5
    %v187 = vadd.f32 %v171, 0.5
    %v188 = vadd.f32 %v172, 0.5
    %v189 = vadd.f32 %v173, 0.5
    %v190 = vadd.f32 %v174, 0.5
    %v191 = vadd.f32 %v175, 0.5
    %v192 = vadd.f32 %v176, 0.5
    %v193 = vadd.f32 %v177, 0.5
    %v194 = vadd.f32 %v178, 0.5
    %v195 = vadd.f32 %v179, 0.5
    %v196 = vadd.f32 %v180, 0.5
    %v197 = vadd.f32 %v181, 0.5
    %v198 = vadd.f32 %v182, 0.5
    %v199 = vadd.f32 %v183, 0.5
    %v200 = vadd.f32 %v184, 0.5
    %v201 = vld [vmem:[%s3] sm:$0xff]
    %v202 = vld [vmem:[%s3 + $0x8] sm:$0xff]
    %v203 = vld [vmem:[%s3 + $0x10] sm:$0xff]
    %v204 = vld [vmem:[%s3 + $0x18] sm:$0xff]
    %v205 = vld [vmem:[%s4] sm:$0xff]
    %v206 = vld [vmem:[%s4 + $0x8] sm:$0xff]
    %v207 = vld [vmem:[%s4 + $0x10] sm:$0xff]
    %v208 = vld [vmem:[%s4 + $0x18] sm:$0xff]
    %210 = vset.pattern.permute.xlu0 0
    %211 = vperm.xlu0 %210, %v205
    %v212 = vpop.permute.xlu0 %211
    %215 = vset.pattern.permute.xlu0 0
    %216 = vperm.xlu0 %215, %v206
    %v217 = vpop.permute.xlu0 %216
    %220 = vset.pattern.permute.xlu0 0
    %221 = vperm.xlu0 %220, %v207
    %v222 = vpop.permute.xlu0 %221
    %225 = vset.pattern.permute.xlu0 0
    %226 = vperm.xlu0 %225, %v208
    %v227 = vpop.permute.xlu0 %226
    %vm229 = vcmask 261120
    %v231 = vsel %vm229, %v201, 0
    %v234 = vsel %vm229, %v202, 0
    %v237 = vsel %vm229, %v203, 0
    %v240 = vsel %vm229, %v204, 0
    %242 = vmatprep.subr.mxu0 %v186
    %243 = vmatpush1.msra.mxu0 %v185
    %244 = vmatprep.subr.mxu0 %v190
    %245 = vmatpush1.msra.mxu0 %v189
    %246 = vmatprep.subr.mxu0 %v194
    %247 = vmatpush1.msra.mxu0 %v193
    %248 = vmatprep.subr.mxu0 %v198
    %249 = vmatpush1.msra.mxu0 %v197
    %250 = vmatprep.subr.mxu0 0.0
    %251 = vmatpush1.msra.mxu0 0.0
    %252 = vmatprep.subr.mxu0 0.0
    %253 = vmatpush1.msra.mxu0 0.0
    %254 = vmatprep.subr.mxu0 0.0
    %255 = vmatpush1.msra.mxu0 0.0
    %256 = vmatprep.subr.mxu0 0.0
    %257 = vmatpush1.msra.mxu0 0.0
    %258 = vmatprep.subr.mxu0 0.0
    %259 = vmatpush1.msra.mxu0 0.0
    %260 = vmatprep.subr.mxu0 0.0
    %261 = vmatpush1.msra.mxu0 0.0
    %262 = vmatprep.subr.mxu0 0.0
    %263 = vmatpush1.msra.mxu0 0.0
    %264 = vmatprep.subr.mxu0 0.0
    %265 = vmatpush1.msra.mxu0 0.0
    %266 = vmatprep.subr.mxu0 0.0
    %267 = vmatpush1.msra.mxu0 0.0
    %268 = vmatprep.subr.mxu0 0.0
    %269 = vmatpush1.msra.mxu0 0.0
    %270 = vmatprep.subr.mxu0 0.0
    %271 = vmatpush1.msra.mxu0 0.0
    %272 = vmatprep.subr.mxu0 0.0
    %273 = vmatpush1.msra.mxu0 0.0
    %274 = vmatprep.subr.mxu0 0.0
    %275 = vmatpush1.msra.mxu0 0.0
    %276 = vmatprep.subr.mxu0 0.0
    %277 = vmatpush1.msra.mxu0 0.0
    %278 = vmatprep.subr.mxu0 0.0
    %279 = vmatpush1.msra.mxu0 0.0
    %280 = vmatprep.subr.mxu0 0.0
    %281 = vmatpush1.msra.mxu0 0.0
    %282 = vmatprep.subr.mxu0 0.0
    %283 = vmatpush1.msra.mxu0 0.0
    %284 = vmatprep.subr.mxu0 0.0
    %285 = vmatpush1.msra.mxu0 0.0
    %286 = vmatprep.subr.mxu0 0.0
    %287 = vmatpush1.msra.mxu0 0.0
    %288 = vmatprep.subr.mxu0 0.0
    %289 = vmatpush1.msra.mxu0 0.0
    %290 = vmatprep.subr.mxu0 0.0
    %291 = vmatpush1.msra.mxu0 0.0
    %292 = vmatprep.subr.mxu0 0.0
    %293 = vmatpush1.msra.mxu0 0.0
    %294 = vmatprep.subr.mxu0 0.0
    %295 = vmatpush1.msra.mxu0 0.0
    %296 = vmatprep.subr.mxu0 0.0
    %297 = vmatpush1.msra.mxu0 0.0
    %298 = vmatprep.subr.mxu0 0.0
    %299 = vmatpush1.msra.mxu0 0.0
    %300 = vmatprep.subr.mxu0 0.0
    %301 = vmatpush1.msra.mxu0 0.0
    %302 = vmatprep.subr.mxu0 0.0
    %303 = vmatpush1.msra.mxu0 0.0
    %304 = vmatprep.subr.mxu0 0.0
    %305 = vmatpush1.msra.mxu0 0.0
    %306 = vmatprep.mubr.f32.mxu0 0.0
    %307 = vmatmul.mubr.f32.gmra.mrb[0].mxu0 %v231
    %v308 = vpop.f32.mrb[0].mxu0
    %v309 = vadd.f32 %v212, %v308
    %v310 = vpop.f32.mrb[0].mxu0
    %v311 = vadd.f32 %v212, %v310
    %312 = vmatprep.mubr.f32.mxu0 0.0
    %313 = vmatmul.mubr.f32.gmra.mrb[0].mxu0 %v234
    %v314 = vpop.f32.mrb[0].mxu0
    %v315 = vadd.f32 %v217, %v314
    %v316 = vpop.f32.mrb[0].mxu0
    %v317 = vadd.f32 %v217, %v316
    %318 = vmatprep.mubr.f32.mxu0 0.0
    %319 = vmatmul.mubr.f32.gmra.mrb[0].mxu0 %v237
    %v320 = vpop.f32.mrb[0].mxu0
    %v321 = vadd.f32 %v222, %v320
    %v322 = vpop.f32.mrb[0].mxu0
    %v323 = vadd.f32 %v222, %v322
    %324 = vmatprep.mubr.f32.mxu0 0.0
    %325 = vmatmul.mubr.f32.gmra.mrb[0].mxu0 %v240
    %v326 = vpop.f32.mrb[0].mxu0
    %v327 = vadd.f32 %v227, %v326
    %v328 = vpop.f32.mrb[0].mxu0
    %v329 = vadd.f32 %v227, %v328
    %330 = vdwg.mxu0
    %331 = vmatprep.subr.mxu0 %v188
    %332 = vmatpush1.msra.mxu0 %v187
    %333 = vmatprep.subr.mxu0 %v192
    %334 = vmatpush1.msra.mxu0 %v191
    %335 = vmatprep.subr.mxu0 %v196
    %336 = vmatpush1.msra.mxu0 %v195
    %337 = vmatprep.subr.mxu0 %v200
    %338 = vmatpush1.msra.mxu0 %v199
    %339 = vmatprep.subr.mxu0 0.0
    %340 = vmatpush1.msra.mxu0 0.0
    %341 = vmatprep.subr.mxu0 0.0
    %342 = vmatpush1.msra.mxu0 0.0
    %343 = vmatprep.subr.mxu0 0.0
    %344 = vmatpush1.msra.mxu0 0.0
    %345 = vmatprep.subr.mxu0 0.0
    %346 = vmatpush1.msra.mxu0 0.0
    %347 = vmatprep.subr.mxu0 0.0
    %348 = vmatpush1.msra.mxu0 0.0
    %349 = vmatprep.subr.mxu0 0.0
    %350 = vmatpush1.msra.mxu0 0.0
    %351 = vmatprep.subr.mxu0 0.0
    %352 = vmatpush1.msra.mxu0 0.0
    %353 = vmatprep.subr.mxu0 0.0
    %354 = vmatpush1.msra.mxu0 0.0
    %355 = vmatprep.subr.mxu0 0.0
    %356 = vmatpush1.msra.mxu0 0.0
    %357 = vmatprep.subr.mxu0 0.0
    %358 = vmatpush1.msra.mxu0 0.0
    %359 = vmatprep.subr.mxu0 0.0
    %360 = vmatpush1.msra.mxu0 0.0
    %361 = vmatprep.subr.mxu0 0.0
    %362 = vmatpush1.msra.mxu0 0.0
    %363 = vmatprep.subr.mxu0 0.0
    %364 = vmatpush1.msra.mxu0 0.0
    %365 = vmatprep.subr.mxu0 0.0
    %366 = vmatpush1.msra.mxu0 0.0
    %367 = vmatprep.subr.mxu0 0.0
    %368 = vmatpush1.msra.mxu0 0.0
    %369 = vmatprep.subr.mxu0 0.0
    %370 = vmatpush1.msra.mxu0 0.0
    %371 = vmatprep.subr.mxu0 0.0
    %372 = vmatpush1.msra.mxu0 0.0
    %373 = vmatprep.subr.mxu0 0.0
    %374 = vmatpush1.msra.mxu0 0.0
    %375 = vmatprep.subr.mxu0 0.0
    %376 = vmatpush1.msra.mxu0 0.0
    %377 = vmatprep.subr.mxu0 0.0
    %378 = vmatpush1.msra.mxu0 0.0
    %379 = vmatprep.subr.mxu0 0.0
    %380 = vmatpush1.msra.mxu0 0.0
    %381 = vmatprep.subr.mxu0 0.0
    %382 = vmatpush1.msra.mxu0 0.0
    %383 = vmatprep.subr.mxu0 0.0
    %384 = vmatpush1.msra.mxu0 0.0
    %385 = vmatprep.subr.mxu0 0.0
    %386 = vmatpush1.msra.mxu0 0.0
    %387 = vmatprep.subr.mxu0 0.0
    %388 = vmatpush1.msra.mxu0 0.0
    %389 = vmatprep.subr.mxu0 0.0
    %390 = vmatpush1.msra.mxu0 0.0
    %391 = vmatprep.subr.mxu0 0.0
    %392 = vmatpush1.msra.mxu0 0.0
    %393 = vmatprep.subr.mxu0 0.0
    %394 = vmatpush1.msra.mxu0 0.0
    %395 = vmatprep.mubr.f32.mxu0 0.0
    %396 = vmatmul.mubr.f32.gmra.mrb[0].mxu0 %v231
    %v397 = vpop.f32.mrb[0].mxu0
    %v398 = vadd.f32 %v212, %v397
    %v399 = vpop.f32.mrb[0].mxu0
    %v400 = vadd.f32 %v212, %v399
    %401 = vmatprep.mubr.f32.mxu0 0.0
    %402 = vmatmul.mubr.f32.gmra.mrb[0].mxu0 %v234
    %v403 = vpop.f32.mrb[0].mxu0
    %v404 = vadd.f32 %v217, %v403
    %v405 = vpop.f32.mrb[0].mxu0
    %v406 = vadd.f32 %v217, %v405
    %407 = vmatprep.mubr.f32.mxu0 0.0
    %408 = vmatmul.mubr.f32.gmra.mrb[0].mxu0 %v237
    %v409 = vpop.f32.mrb[0].mxu0
    %v410 = vadd.f32 %v222, %v409
    %v411 = vpop.f32.mrb[0].mxu0
    %v412 = vadd.f32 %v222, %v411
    %413 = vmatprep.mubr.f32.mxu0 0.0
    %414 = vmatmul.mubr.f32.gmra.mrb[0].mxu0 %v240
    %v415 = vpop.f32.mrb[0].mxu0
    %v416 = vadd.f32 %v227, %v415
    %v417 = vpop.f32.mrb[0].mxu0
    %v418 = vadd.f32 %v227, %v417
    %419 = vdwg.mxu0
    %v420 = vmul.f32 %v309, 0.5
    %v421 = vmul.f32 %v311, 0.5
    %v422 = vmul.f32 %v398, 0.5
    %v423 = vmul.f32 %v400, 0.5
    %v424 = vmul.f32 %v315, 0.5
    %v425 = vmul.f32 %v317, 0.5
    %v426 = vmul.f32 %v404, 0.5
    %v427 = vmul.f32 %v406, 0.5
    %v428 = vmul.f32 %v321, 0.5
    %v429 = vmul.f32 %v323, 0.5
    %v430 = vmul.f32 %v410, 0.5
    %v431 = vmul.f32 %v412, 0.5
    %v432 = vmul.f32 %v327, 0.5
    %v433 = vmul.f32 %v329, 0.5
    %v434 = vmul.f32 %v416, 0.5
    %v435 = vmul.f32 %v418, 0.5
    %v436 = vtanh.pop %v420
    %v437 = vtanh.pop %v421
    %v438 = vtanh.pop %v422
    %v439 = vtanh.pop %v423
    %v440 = vtanh.pop %v424
    %v441 = vtanh.pop %v425
    %v442 = vtanh.pop %v426
    %v443 = vtanh.pop %v427
    %v444 = vtanh.pop %v428
    %v445 = vtanh.pop %v429
    %v446 = vtanh.pop %v430
    %v447 = vtanh.pop %v431
    %v448 = vtanh.pop %v432
    %v449 = vtanh.pop %v433
    %v450 = vtanh.pop %v434
    %v451 = vtanh.pop %v435
    %v452 = vmul.f32 %v436, 0.5
    %v453 = vmul.f32 %v437, 0.5
    %v454 = vmul.f32 %v438, 0.5
    %v455 = vmul.f32 %v439, 0.5
    %v456 = vmul.f32 %v440, 0.5
    %v457 = vmul.f32 %v441, 0.5
    %v458 = vmul.f32 %v442, 0.5
    %v459 = vmul.f32 %v443, 0.5
    %v460 = vmul.f32 %v444, 0.5
    %v461 = vmul.f32 %v445, 0.5
    %v462 = vmul.f32 %v446, 0.5
    %v463 = vmul.f32 %v447, 0.5
    %v464 = vmul.f32 %v448, 0.5
    %v465 = vmul.f32 %v449, 0.5
    %v466 = vmul.f32 %v450, 0.5
    %v467 = vmul.f32 %v451, 0.5
    %v468 = vadd.f32 %v452, 0.5
    %v469 = vadd.f32 %v453, 0.5
    %v470 = vadd.f32 %v454, 0.5
    %v471 = vadd.f32 %v455, 0.5
    %v472 = vadd.f32 %v456, 0.5
    %v473 = vadd.f32 %v457, 0.5
    %v474 = vadd.f32 %v458, 0.5
    %v475 = vadd.f32 %v459, 0.5
    %v476 = vadd.f32 %v460, 0.5
    %v477 = vadd.f32 %v461, 0.5
    %v478 = vadd.f32 %v462, 0.5
    %v479 = vadd.f32 %v463, 0.5
    %v480 = vadd.f32 %v464, 0.5
    %v481 = vadd.f32 %v465, 0.5
    %v482 = vadd.f32 %v466, 0.5
    %v483 = vadd.f32 %v467, 0.5
    %v484 = vld [vmem:[%s5] sm:$0xff]
    %v485 = vld [vmem:[%s5 + $0x8] sm:$0xff]
    %v486 = vld [vmem:[%s5 + $0x10] sm:$0xff]
    %v487 = vld [vmem:[%s5 + $0x18] sm:$0xff]
    %v488 = vld [vmem:[%s6] sm:$0xff]
    %v489 = vld [vmem:[%s6 + $0x8] sm:$0xff]
    %v490 = vld [vmem:[%s6 + $0x10] sm:$0xff]
    %v491 = vld [vmem:[%s6 + $0x18] sm:$0xff]
    %493 = vset.pattern.permute.xlu0 0
    %494 = vperm.xlu0 %493, %v488
    %v495 = vpop.permute.xlu0 %494
    %498 = vset.pattern.permute.xlu0 0
    %499 = vperm.xlu0 %498, %v489
    %v500 = vpop.permute.xlu0 %499
    %503 = vset.pattern.permute.xlu0 0
    %504 = vperm.xlu0 %503, %v490
    %v505 = vpop.permute.xlu0 %504
    %508 = vset.pattern.permute.xlu0 0
    %509 = vperm.xlu0 %508, %v491
    %v510 = vpop.permute.xlu0 %509
    %v513 = vsel %vm229, %v484, 0
    %v516 = vsel %vm229, %v485, 0
    %v519 = vsel %vm229, %v486, 0
    %v522 = vsel %vm229, %v487, 0
    %524 = vmatprep.subr.mxu0 %v469
    %525 = vmatpush1.msra.mxu0 %v468
    %526 = vmatprep.subr.mxu0 %v473
    %527 = vmatpush1.msra.mxu0 %v472
    %528 = vmatprep.subr.mxu0 %v477
    %529 = vmatpush1.msra.mxu0 %v476
    %530 = vmatprep.subr.mxu0 %v481
    %531 = vmatpush1.msra.mxu0 %v480
    %532 = vmatprep.subr.mxu0 0.0
    %533 = vmatpush1.msra.mxu0 0.0
    %534 = vmatprep.subr.mxu0 0.0
    %535 = vmatpush1.msra.mxu0 0.0
    %536 = vmatprep.subr.mxu0 0.0
    %537 = vmatpush1.msra.mxu0 0.0
    %538 = vmatprep.subr.mxu0 0.0
    %539 = vmatpush1.msra.mxu0 0.0
    %540 = vmatprep.subr.mxu0 0.0
    %541 = vmatpush1.msra.mxu0 0.0
    %542 = vmatprep.subr.mxu0 0.0
    %543 = vmatpush1.msra.mxu0 0.0
    %544 = vmatprep.subr.mxu0 0.0
    %545 = vmatpush1.msra.mxu0 0.0
    %546 = vmatprep.subr.mxu0 0.0
    %547 = vmatpush1.msra.mxu0 0.0
    %548 = vmatprep.subr.mxu0 0.0
    %549 = vmatpush1.msra.mxu0 0.0
    %550 = vmatprep.subr.mxu0 0.0
    %551 = vmatpush1.msra.mxu0 0.0
    %552 = vmatprep.subr.mxu0 0.0
    %553 = vmatpush1.msra.mxu0 0.0
    %554 = vmatprep.subr.mxu0 0.0
    %555 = vmatpush1.msra.mxu0 0.0
    %556 = vmatprep.subr.mxu0 0.0
    %557 = vmatpush1.msra.mxu0 0.0
    %558 = vmatprep.subr.mxu0 0.0
    %559 = vmatpush1.msra.mxu0 0.0
    %560 = vmatprep.subr.mxu0 0.0
    %561 = vmatpush1.msra.mxu0 0.0
    %562 = vmatprep.subr.mxu0 0.0
    %563 = vmatpush1.msra.mxu0 0.0
    %564 = vmatprep.subr.mxu0 0.0
    %565 = vmatpush1.msra.mxu0 0.0
    %566 = vmatprep.subr.mxu0 0.0
    %567 = vmatpush1.msra.mxu0 0.0
    %568 = vmatprep.subr.mxu0 0.0
    %569 = vmatpush1.msra.mxu0 0.0
    %570 = vmatprep.subr.mxu0 0.0
    %571 = vmatpush1.msra.mxu0 0.0
    %572 = vmatprep.subr.mxu0 0.0
    %573 = vmatpush1.msra.mxu0 0.0
    %574 = vmatprep.subr.mxu0 0.0
    %575 = vmatpush1.msra.mxu0 0.0
    %576 = vmatprep.subr.mxu0 0.0
    %577 = vmatpush1.msra.mxu0 0.0
    %578 = vmatprep.subr.mxu0 0.0
    %579 = vmatpush1.msra.mxu0 0.0
    %580 = vmatprep.subr.mxu0 0.0
    %581 = vmatpush1.msra.mxu0 0.0
    %582 = vmatprep.subr.mxu0 0.0
    %583 = vmatpush1.msra.mxu0 0.0
    %584 = vmatprep.subr.mxu0 0.0
    %585 = vmatpush1.msra.mxu0 0.0
    %586 = vmatprep.subr.mxu0 0.0
    %587 = vmatpush1.msra.mxu0 0.0
    %588 = vmatprep.mubr.f32.mxu0 0.0
    %589 = vmatmul.mubr.f32.gmra.mrb[0].mxu0 %v513
    %v590 = vpop.f32.mrb[0].mxu0
    %v591 = vadd.f32 %v495, %v590
    %v592 = vpop.f32.mrb[0].mxu0
    %v593 = vadd.f32 %v495, %v592
    %594 = vmatprep.mubr.f32.mxu0 0.0
    %595 = vmatmul.mubr.f32.gmra.mrb[0].mxu0 %v516
    %v596 = vpop.f32.mrb[0].mxu0
    %v597 = vadd.f32 %v500, %v596
    %v598 = vpop.f32.mrb[0].mxu0
    %v599 = vadd.f32 %v500, %v598
    %600 = vmatprep.mubr.f32.mxu0 0.0
    %601 = vmatmul.mubr.f32.gmra.mrb[0].mxu0 %v519
    %v602 = vpop.f32.mrb[0].mxu0
    %v603 = vadd.f32 %v505, %v602
    %v604 = vpop.f32.mrb[0].mxu0
    %v605 = vadd.f32 %v505, %v604
    %606 = vmatprep.mubr.f32.mxu0 0.0
    %607 = vmatmul.mubr.f32.gmra.mrb[0].mxu0 %v522
    %v608 = vpop.f32.mrb[0].mxu0
    %v609 = vadd.f32 %v510, %v608
    %v610 = vpop.f32.mrb[0].mxu0
    %v611 = vadd.f32 %v510, %v610
    %612 = vdwg.mxu0
    %613 = vmatprep.subr.mxu0 %v471
    %614 = vmatpush1.msra.mxu0 %v470
    %615 = vmatprep.subr.mxu0 %v475
    %616 = vmatpush1.msra.mxu0 %v474
    %617 = vmatprep.subr.mxu0 %v479
    %618 = vmatpush1.msra.mxu0 %v478
    %619 = vmatprep.subr.mxu0 %v483
    %620 = vmatpush1.msra.mxu0 %v482
    %621 = vmatprep.subr.mxu0 0.0
    %622 = vmatpush1.msra.mxu0 0.0
    %623 = vmatprep.subr.mxu0 0.0
    %624 = vmatpush1.msra.mxu0 0.0
    %625 = vmatprep.subr.mxu0 0.0
    %626 = vmatpush1.msra.mxu0 0.0
    %627 = vmatprep.subr.mxu0 0.0
    %628 = vmatpush1.msra.mxu0 0.0
    %629 = vmatprep.subr.mxu0 0.0
    %630 = vmatpush1.msra.mxu0 0.0
    %631 = vmatprep.subr.mxu0 0.0
    %632 = vmatpush1.msra.mxu0 0.0
    %633 = vmatprep.subr.mxu0 0.0
    %634 = vmatpush1.msra.mxu0 0.0
    %635 = vmatprep.subr.mxu0 0.0
    %636 = vmatpush1.msra.mxu0 0.0
    %637 = vmatprep.subr.mxu0 0.0
    %638 = vmatpush1.msra.mxu0 0.0
    %639 = vmatprep.subr.mxu0 0.0
    %640 = vmatpush1.msra.mxu0 0.0
    %641 = vmatprep.subr.mxu0 0.0
    %642 = vmatpush1.msra.mxu0 0.0
    %643 = vmatprep.subr.mxu0 0.0
    %644 = vmatpush1.msra.mxu0 0.0
    %645 = vmatprep.subr.mxu0 0.0
    %646 = vmatpush1.msra.mxu0 0.0
    %647 = vmatprep.subr.mxu0 0.0
    %648 = vmatpush1.msra.mxu0 0.0
    %649 = vmatprep.subr.mxu0 0.0
    %650 = vmatpush1.msra.mxu0 0.0
    %651 = vmatprep.subr.mxu0 0.0
    %652 = vmatpush1.msra.mxu0 0.0
    %653 = vmatprep.subr.mxu0 0.0
    %654 = vmatpush1.msra.mxu0 0.0
    %655 = vmatprep.subr.mxu0 0.0
    %656 = vmatpush1.msra.mxu0 0.0
    %657 = vmatprep.subr.mxu0 0.0
    %658 = vmatpush1.msra.mxu0 0.0
    %659 = vmatprep.subr.mxu0 0.0
    %660 = vmatpush1.msra.mxu0 0.0
    %661 = vmatprep.subr.mxu0 0.0
    %662 = vmatpush1.msra.mxu0 0.0
    %663 = vmatprep.subr.mxu0 0.0
    %664 = vmatpush1.msra.mxu0 0.0
    %665 = vmatprep.subr.mxu0 0.0
    %666 = vmatpush1.msra.mxu0 0.0
    %667 = vmatprep.subr.mxu0 0.0
    %668 = vmatpush1.msra.mxu0 0.0
    %669 = vmatprep.subr.mxu0 0.0
    %670 = vmatpush1.msra.mxu0 0.0
    %671 = vmatprep.subr.mxu0 0.0
    %672 = vmatpush1.msra.mxu0 0.0
    %673 = vmatprep.subr.mxu0 0.0
    %674 = vmatpush1.msra.mxu0 0.0
    %675 = vmatprep.subr.mxu0 0.0
    %676 = vmatpush1.msra.mxu0 0.0
    %677 = vmatprep.mubr.f32.mxu0 0.0
    %678 = vmatmul.mubr.f32.gmra.mrb[0].mxu0 %v513
    %v679 = vpop.f32.mrb[0].mxu0
    %v680 = vadd.f32 %v495, %v679
    %v681 = vpop.f32.mrb[0].mxu0
    %v682 = vadd.f32 %v495, %v681
    %683 = vmatprep.mubr.f32.mxu0 0.0
    %684 = vmatmul.mubr.f32.gmra.mrb[0].mxu0 %v516
    %v685 = vpop.f32.mrb[0].mxu0
    %v686 = vadd.f32 %v500, %v685
    %v687 = vpop.f32.mrb[0].mxu0
    %v688 = vadd.f32 %v500, %v687
    %689 = vmatprep.mubr.f32.mxu0 0.0
    %690 = vmatmul.mubr.f32.gmra.mrb[0].mxu0 %v519
    %v691 = vpop.f32.mrb[0].mxu0
    %v692 = vadd.f32 %v505, %v691
    %v693 = vpop.f32.mrb[0].mxu0
    %v694 = vadd.f32 %v505, %v693
    %695 = vmatprep.mubr.f32.mxu0 0.0
    %696 = vmatmul.mubr.f32.gmra.mrb[0].mxu0 %v522
    %v697 = vpop.f32.mrb[0].mxu0
    %v698 = vadd.f32 %v510, %v697
    %v699 = vpop.f32.mrb[0].mxu0
    %v700 = vadd.f32 %v510, %v699
    %701 = vdwg.mxu0
    %v702 = vmul.f32 %v591, 0.5
    %v703 = vmul.f32 %v593, 0.5
    %v704 = vmul.f32 %v680, 0.5
    %v705 = vmul.f32 %v682, 0.5
    %v706 = vmul.f32 %v597, 0.5
    %v707 = vmul.f32 %v599, 0.5
    %v708 = vmul.f32 %v686, 0.5
    %v709 = vmul.f32 %v688, 0.5
    %v710 = vmul.f32 %v603, 0.5
    %v711 = vmul.f32 %v605, 0.5
    %v712 = vmul.f32 %v692, 0.5
    %v713 = vmul.f32 %v694, 0.5
    %v714 = vmul.f32 %v609, 0.5
    %v715 = vmul.f32 %v611, 0.5
    %v716 = vmul.f32 %v698, 0.5
    %v717 = vmul.f32 %v700, 0.5
    %v718 = vtanh.pop %v702
    %v719 = vtanh.pop %v703
    %v720 = vtanh.pop %v704
    %v721 = vtanh.pop %v705
    %v722 = vtanh.pop %v706
    %v723 = vtanh.pop %v707
    %v724 = vtanh.pop %v708
    %v725 = vtanh.pop %v709
    %v726 = vtanh.pop %v710
    %v727 = vtanh.pop %v711
    %v728 = vtanh.pop %v712
    %v729 = vtanh.pop %v713
    %v730 = vtanh.pop %v714
    %v731 = vtanh.pop %v715
    %v732 = vtanh.pop %v716
    %v733 = vtanh.pop %v717
    %v734 = vmul.f32 %v718, 0.5
    %v735 = vmul.f32 %v719, 0.5
    %v736 = vmul.f32 %v720, 0.5
    %v737 = vmul.f32 %v721, 0.5
    %v738 = vmul.f32 %v722, 0.5
    %v739 = vmul.f32 %v723, 0.5
    %v740 = vmul.f32 %v724, 0.5
    %v741 = vmul.f32 %v725, 0.5
    %v742 = vmul.f32 %v726, 0.5
    %v743 = vmul.f32 %v727, 0.5
    %v744 = vmul.f32 %v728, 0.5
    %v745 = vmul.f32 %v729, 0.5
    %v746 = vmul.f32 %v730, 0.5
    %v747 = vmul.f32 %v731, 0.5
    %v748 = vmul.f32 %v732, 0.5
    %v749 = vmul.f32 %v733, 0.5
    %v750 = vadd.f32 %v734, 0.5
    %v751 = vadd.f32 %v735, 0.5
    %v752 = vadd.f32 %v736, 0.5
    %v753 = vadd.f32 %v737, 0.5
    %v754 = vadd.f32 %v738, 0.5
    %v755 = vadd.f32 %v739, 0.5
    %v756 = vadd.f32 %v740, 0.5
    %v757 = vadd.f32 %v741, 0.5
    %v758 = vadd.f32 %v742, 0.5
    %v759 = vadd.f32 %v743, 0.5
    %v760 = vadd.f32 %v744, 0.5
    %v761 = vadd.f32 %v745, 0.5
    %v762 = vadd.f32 %v746, 0.5
    %v763 = vadd.f32 %v747, 0.5
    %v764 = vadd.f32 %v748, 0.5
    %v765 = vadd.f32 %v749, 0.5
    %v766 = vld [vmem:[%s7] sm:$0x1]
    %v767 = vld [vmem:[#allocation2] sm:$0x1]
    %769 = vset.pattern.permute.xlu0 0
    %770 = vperm.xlu0 %769, %v767
    %v771 = vpop.permute.xlu0 %770
    %v773 = vlaneseq
    %v774 = vshrl.u32 %v773, 7
    %v775 = vsub.s32 0, %v774
    %v776 = vrot.slane %v771, %v775
    %v778 = vsel %vm229, %v766, 0
    %780 = vmatprep.subr.mxu0 %v751
    %781 = vmatpush1.msra.mxu0 %v750
    %782 = vmatprep.subr.mxu0 %v755
    %783 = vmatpush1.msra.mxu0 %v754
    %784 = vmatprep.subr.mxu0 %v759
    %785 = vmatpush1.msra.mxu0 %v758
    %786 = vmatprep.subr.mxu0 %v763
    %787 = vmatpush1.msra.mxu0 %v762
    %788 = vmatprep.subr.mxu0 0.0
    %789 = vmatpush1.msra.mxu0 0.0
    %790 = vmatprep.subr.mxu0 0.0
    %791 = vmatpush1.msra.mxu0 0.0
    %792 = vmatprep.subr.mxu0 0.0
    %793 = vmatpush1.msra.mxu0 0.0
    %794 = vmatprep.subr.mxu0 0.0
    %795 = vmatpush1.msra.mxu0 0.0
    %796 = vmatprep.subr.mxu0 0.0
    %797 = vmatpush1.msra.mxu0 0.0
    %798 = vmatprep.subr.mxu0 0.0
    %799 = vmatpush1.msra.mxu0 0.0
    %800 = vmatprep.subr.mxu0 0.0
    %801 = vmatpush1.msra.mxu0 0.0
    %802 = vmatprep.subr.mxu0 0.0
    %803 = vmatpush1.msra.mxu0 0.0
    %804 = vmatprep.subr.mxu0 0.0
    %805 = vmatpush1.msra.mxu0 0.0
    %806 = vmatprep.subr.mxu0 0.0
    %807 = vmatpush1.msra.mxu0 0.0
    %808 = vmatprep.subr.mxu0 0.0
    %809 = vmatpush1.msra.mxu0 0.0
    %810 = vmatprep.subr.mxu0 0.0
    %811 = vmatpush1.msra.mxu0 0.0
    %812 = vmatprep.subr.mxu0 0.0
    %813 = vmatpush1.msra.mxu0 0.0
    %814 = vmatprep.subr.mxu0 0.0
    %815 = vmatpush1.msra.mxu0 0.0
    %816 = vmatprep.subr.mxu0 0.0
    %817 = vmatpush1.msra.mxu0 0.0
    %818 = vmatprep.subr.mxu0 0.0
    %819 = vmatpush1.msra.mxu0 0.0
    %820 = vmatprep.subr.mxu0 0.0
    %821 = vmatpush1.msra.mxu0 0.0
    %822 = vmatprep.subr.mxu0 0.0
    %823 = vmatpush1.msra.mxu0 0.0
    %824 = vmatprep.subr.mxu0 0.0
    %825 = vmatpush1.msra.mxu0 0.0
    %826 = vmatprep.subr.mxu0 0.0
    %827 = vmatpush1.msra.mxu0 0.0
    %828 = vmatprep.subr.mxu0 0.0
    %829 = vmatpush1.msra.mxu0 0.0
    %830 = vmatprep.subr.mxu0 0.0
    %831 = vmatpush1.msra.mxu0 0.0
    %832 = vmatprep.subr.mxu0 0.0
    %833 = vmatpush1.msra.mxu0 0.0
    %834 = vmatprep.subr.mxu0 0.0
    %835 = vmatpush1.msra.mxu0 0.0
    %836 = vmatprep.subr.mxu0 0.0
    %837 = vmatpush1.msra.mxu0 0.0
    %838 = vmatprep.subr.mxu0 0.0
    %839 = vmatpush1.msra.mxu0 0.0
    %840 = vmatprep.subr.mxu0 0.0
    %841 = vmatpush1.msra.mxu0 0.0
    %842 = vmatprep.subr.mxu0 0.0
    %843 = vmatpush1.msra.mxu0 0.0
    %844 = vmatprep.mubr.f32.mxu0 0.0
    %845 = vmatmul.mubr.f32.gmra.mrb[0].mxu0 %v778
    %v846 = vpop.f32.mrb[0].mxu0
    %v847 = vadd.f32 %v776, %v846
    %v848 = vpop.f32.mrb[0].mxu0
    %v849 = vadd.f32 %v776, %v848
    %850 = vdwg.mxu0
    %851 = vmatprep.subr.mxu0 %v753
    %852 = vmatpush1.msra.mxu0 %v752
    %853 = vmatprep.subr.mxu0 %v757
    %854 = vmatpush1.msra.mxu0 %v756
    %855 = vmatprep.subr.mxu0 %v761
    %856 = vmatpush1.msra.mxu0 %v760
    %857 = vmatprep.subr.mxu0 %v765
    %858 = vmatpush1.msra.mxu0 %v764
    %859 = vmatprep.subr.mxu0 0.0
    %860 = vmatpush1.msra.mxu0 0.0
    %861 = vmatprep.subr.mxu0 0.0
    %862 = vmatpush1.msra.mxu0 0.0
    %863 = vmatprep.subr.mxu0 0.0
    %864 = vmatpush1.msra.mxu0 0.0
    %865 = vmatprep.subr.mxu0 0.0
    %866 = vmatpush1.msra.mxu0 0.0
    %867 = vmatprep.subr.mxu0 0.0
    %868 = vmatpush1.msra.mxu0 0.0
    %869 = vmatprep.subr.mxu0 0.0
    %870 = vmatpush1.msra.mxu0 0.0
    %871 = vmatprep.subr.mxu0 0.0
    %872 = vmatpush1.msra.mxu0 0.0
    %873 = vmatprep.subr.mxu0 0.0
    %874 = vmatpush1.msra.mxu0 0.0
    %875 = vmatprep.subr.mxu0 0.0
    %876 = vmatpush1.msra.mxu0 0.0
    %877 = vmatprep.subr.mxu0 0.0
    %878 = vmatpush1.msra.mxu0 0.0
    %879 = vmatprep.subr.mxu0 0.0
    %880 = vmatpush1.msra.mxu0 0.0
    %881 = vmatprep.subr.mxu0 0.0
    %882 = vmatpush1.msra.mxu0 0.0
    %883 = vmatprep.subr.mxu0 0.0
    %884 = vmatpush1.msra.mxu0 0.0
    %885 = vmatprep.subr.mxu0 0.0
    %886 = vmatpush1.msra.mxu0 0.0
    %887 = vmatprep.subr.mxu0 0.0
    %888 = vmatpush1.msra.mxu0 0.0
    %889 = vmatprep.subr.mxu0 0.0
    %890 = vmatpush1.msra.mxu0 0.0
    %891 = vmatprep.subr.mxu0 0.0
    %892 = vmatpush1.msra.mxu0 0.0
    %893 = vmatprep.subr.mxu0 0.0
    %894 = vmatpush1.msra.mxu0 0.0
    %895 = vmatprep.subr.mxu0 0.0
    %896 = vmatpush1.msra.mxu0 0.0
    %897 = vmatprep.subr.mxu0 0.0
    %898 = vmatpush1.msra.mxu0 0.0
    %899 = vmatprep.subr.mxu0 0.0
    %900 = vmatpush1.msra.mxu0 0.0
    %901 = vmatprep.subr.mxu0 0.0
    %902 = vmatpush1.msra.mxu0 0.0
    %903 = vmatprep.subr.mxu0 0.0
    %904 = vmatpush1.msra.mxu0 0.0
    %905 = vmatprep.subr.mxu0 0.0
    %906 = vmatpush1.msra.mxu0 0.0
    %907 = vmatprep.subr.mxu0 0.0
    %908 = vmatpush1.msra.mxu0 0.0
    %909 = vmatprep.subr.mxu0 0.0
    %910 = vmatpush1.msra.mxu0 0.0
    %911 = vmatprep.subr.mxu0 0.0
    %912 = vmatpush1.msra.mxu0 0.0
    %913 = vmatprep.subr.mxu0 0.0
    %914 = vmatpush1.msra.mxu0 0.0
    %915 = vmatprep.mubr.f32.mxu0 0.0
    %916 = vmatmul.mubr.f32.gmra.mrb[0].mxu0 %v778
    %v917 = vpop.f32.mrb[0].mxu0
    %v918 = vadd.f32 %v776, %v917
    %v919 = vpop.f32.mrb[0].mxu0
    %v920 = vadd.f32 %v776, %v919
    %921 = vdwg.mxu0
    %v926 = vcombine.low %v847, %v849
    %v927 = vcombine.low %v918, %v920
    %v929 = vunpack.c.l.s4 1966171168
    %v930 = vunpack.c.0.s8 %v929
    %v931 = vlaneseq
    %v932 = vshrl.u32 %v931, 7
    %v933 = vsub.s32 %v930, %v932
    %v934 = vrot.slane %v926, %v933
    %v936 = vunpack.c.l.s4 1966171168
    %v937 = vunpack.c.0.s8 %v936
    %v938 = vlaneseq
    %v939 = vshrl.u32 %v938, 7
    %v940 = vsub.s32 %v937, %v939
    %v941 = vrot.slane %v927, %v940
    %v942 = vcombine.low %v934, %v941
    %v944 = vunpack.c.l.s4 1966171168
    %v945 = vunpack.c.0.s8 %v944
    %v946 = vlaneseq
    %v947 = vshrl.u32 %v946, 7
    %v948 = vsub.s32 %v945, %v947
    %v949 = vrot.slane %v942, %v948
    %v951 = vlaneseq
    %vm952 = vcmp.ge.s32.totalorder %v951, 0
    %vm953 = vcmp.lt.s32.totalorder %v951, 512
    %vm954 = vmand %vm952, %vm953
    %955 = vst.msk [vmem:[#allocation3] sm:$0xf] %vm954, %v949
    // Predicated region
    $region38: #{tpu_custom_call.1} parent=1 // pred_check
      _
    $region39: #{tpu_custom_call.1} parent=1 // pred_check_branch
      %957 = sbr.rel (0) target = $region41
    $region40: #{tpu_custom_call.1} parent=1 // pred_region
      %s959 = ssub.s32 64, 64
      %960 = vsyncadd [#allocation4], %s959
      %s962 = sshll.u32 [#allocation3], 4
      %s963 = int_to_ptr.vmem [resolvable:$true] %s962
      %965 = dma.vmem_to_hbm [thread:$0]  %s963, 64, %s9, [#allocation4]
    $region41: #{tpu_custom_call.1} parent=1 // pred_fallthru
      _
    // Predicated region
    $region42: #{tpu_custom_call.1} parent=1 // pred_check
      _
    $region43: #{tpu_custom_call.1} parent=1 // pred_check_branch
      %967 = sbr.rel (0) target = $region45
    $region44: #{tpu_custom_call.1} parent=1 // pred_region
      %968 = dma.done [#allocation4], 64
    $region45: #{tpu_custom_call.1} parent=1 // pred_fallthru
      _
    %969 = vsyncpa [#allocation4], 1

</llo_original>
